<compile_context>
chip_gen: v7x
topology: tpu7x:2x2x1
jax: 0.10.0
libtpu: 0.0.40
codegen_flags: <defaults>
</compile_context>

<pallas_src>
import jax
import jax.numpy as jnp
from jax import lax
from jax.experimental import pallas as pl
from jax.experimental.pallas import tpu as pltpu

_LANES = 128


def _round_up(x, m):
    return ((x + m - 1) // m) * m


def netlgcn2_kernel(xs_ref, w1_ref, b1_ref, wf1_ref, bf1_ref,
                    wf2_ref, bf2_ref, out_ref):
    # xs_ref: (c_in + 1, tn); row 0 = per-node diagonal scale, rows 1.. = x^T.
    c_in = xs_ref.shape[0] - 1
    scale = xs_ref[0:1, :]                                  # (1, tn)
    x_t = xs_ref[1:1 + c_in, :]                             # (c_in, tn)

    if c_in == 1:
        # K=1 contraction == outer product: VPU broadcast multiply, no MXU.
        xw = w1_ref[...] * x_t                              # (d1,1)*(1,tn) -> (d1,tn)
    else:
        xw = jnp.dot(w1_ref[...], x_t, preferred_element_type=jnp.float32)

    # Diagonal aggregation (per-node scale broadcast over feature sublanes),
    # conv bias, ReLU.
    h = jnp.maximum(scale * xw + b1_ref[...], 0.0)          # (d1, tn)

    # TODO(synk): F.dropout(training=True) is stochastic and cannot match torch
    # RNG; implemented as identity (eval semantics).

    # fc1 + ReLU  ((d2,d1) @ (d1,tn))
    h1 = jnp.maximum(
        jnp.dot(wf1_ref[...], h, preferred_element_type=jnp.float32)
        + bf1_ref[...], 0.0)                                # (d2, tn)

    # fc2 -> lane-dense (c_out, tn) slab, unmasked full-lane stores.
    out_ref[...] = (
        jnp.dot(wf2_ref[...], h1, preferred_element_type=jnp.float32)
        + bf2_ref[...])                                     # (c_out, tn)


def netlgcn2_forward(x, edge_neighbors, params, *, tn=None):
    """x: (N, num_features) f32, edge_neighbors: (2, E) int32."""
    N, c_in = x.shape
    row, col = edge_neighbors[0], edge_neighbors[1]
    dtype = x.dtype

    # --- GCN normalization with self-loops (improved=False, all weights 1) ---
    # deg[i]   = #{e : row[e]==i} + 1                      (self-loop)
    # scale[i] = sum_{e: row'[e]==i} deg_inv[row'[e]]*deg_inv[col'[e]]
    #          = deg_inv[i] * ( segsum(deg_inv[col], row)[i] + deg_inv[i] )
    ones_e = jnp.ones(row.shape, dtype)
    deg = jnp.zeros((N,), dtype).at[row].add(ones_e) + jnp.ones((N,), dtype)
    deg_inv = jnp.where(deg > 0, lax.rsqrt(deg), jnp.zeros_like(deg))
    neigh = jnp.zeros((N,), dtype).at[row].add(deg_inv[col])
    scale = deg_inv * (neigh + deg_inv)

    d1 = params["w_conv"].shape[1]
    d2 = params["w_fc1"].shape[1]
    c_out = params["w_fc2"].shape[1]

    # --- node (lane) tiling ---
    if tn is None:
        tn = 2048                      # >=2048 keeps step overhead amortized
    n128 = _round_up(N, _LANES)
    tn = _round_up(min(tn, n128), _LANES)
    if n128 <= tn and n128 >= 2 * _LANES:
        # Whole problem would be one grid step: split so the "parallel" axis
        # can be sharded across v7x's two TensorCores.
        tn = _round_up(pl.cdiv(n128, 2), _LANES)
    grid_n = pl.cdiv(N, tn)
    n_pad = grid_n * tn

    # --- packed input slab: row 0 = scale, rows 1.. = x^T, lane-padded ---
    xs = jnp.concatenate(
        [scale[None, :], jnp.transpose(x).astype(jnp.float32)], axis=0)
    if n_pad != N:
        xs = jnp.pad(xs, ((0, 0), (0, n_pad - N)))

    # --- transposed weights / column biases (feature-in-sublanes layout) ---
    w1_t = jnp.transpose(params["w_conv"]).astype(jnp.float32)      # (d1, c_in)
    b1_c = params["b_conv"].reshape(d1, 1).astype(jnp.float32)
    wf1_t = jnp.transpose(params["w_fc1"]).astype(jnp.float32)      # (d2, d1)
    bf1_c = params["b_fc1"].reshape(d2, 1).astype(jnp.float32)
    wf2_t = jnp.transpose(params["w_fc2"]).astype(jnp.float32)      # (c_out, d2)
    bf2_c = params["b_fc2"].reshape(c_out, 1).astype(jnp.float32)

    flops = 2 * n_pad * (c_in * d1 + d1 * d2 + d2 * c_out) + 4 * n_pad * d1
    bytes_accessed = 4 * (xs.size + w1_t.size + b1_c.size + wf1_t.size
                          + bf1_c.size + wf2_t.size + bf2_c.size
                          + c_out * n_pad)
    cost = pl.CostEstimate(flops=int(flops), transcendentals=0,
                           bytes_accessed=int(bytes_accessed))

    out_t = pl.pallas_call(
        netlgcn2_kernel,
        out_shape=jax.ShapeDtypeStruct((c_out, n_pad), jnp.float32),
        grid=(grid_n,),
        in_specs=[
            pl.BlockSpec((c_in + 1, tn), lambda i: (0, i)),   # scale ++ x^T
            pl.BlockSpec((d1, c_in), lambda i: (0, 0)),       # w_conv^T
            pl.BlockSpec((d1, 1), lambda i: (0, 0)),          # b_conv
            pl.BlockSpec((d2, d1), lambda i: (0, 0)),         # w_fc1^T
            pl.BlockSpec((d2, 1), lambda i: (0, 0)),          # b_fc1
            pl.BlockSpec((c_out, d2), lambda i: (0, 0)),      # w_fc2^T
            pl.BlockSpec((c_out, 1), lambda i: (0, 0)),       # b_fc2
        ],
        out_specs=pl.BlockSpec((c_out, tn), lambda i: (0, i)),
        compiler_params=pltpu.CompilerParams(
            dimension_semantics=("parallel",)),
        cost_estimate=cost,
    )(xs, w1_t, b1_c, wf1_t, bf1_c, wf2_t, bf2_c)

    return jnp.transpose(out_t[:, :N])                        # (N, c_out)


def _reference(x, edge_neighbors, params):
    """Pure-JAX reference of the same forward (dropout as identity)."""
    N = x.shape[0]
    row, col = edge_neighbors[0], edge_neighbors[1]
    loop = jnp.arange(N, dtype=row.dtype)
    row = jnp.concatenate([row, loop])
    col = jnp.concatenate([col, loop])
    edge_weight = jnp.ones(row.shape, x.dtype)
    deg = jnp.zeros((N,), x.dtype).at[row].add(edge_weight)
    deg_inv = jnp.where(deg > 0, lax.rsqrt(deg), jnp.zeros_like(deg))
    norm = deg_inv[row] * edge_weight * deg_inv[col]
    scale = jnp.zeros((N,), x.dtype).at[row].add(norm)
    xw = x @ params["w_conv"]
    h = jnp.maximum(scale[:, None] * xw + params["b_conv"], 0.0)
    h1 = jnp.maximum(h @ params["w_fc1"] + params["b_fc1"], 0.0)
    return h1 @ params["w_fc2"] + params["b_fc2"]


def _glorot(key, shape):
    fan_in, fan_out = shape
    limit = (6.0 / (fan_in + fan_out)) ** 0.5
    return jax.random.uniform(key, shape, jnp.float32, -limit, limit)


if __name__ == "__main__":
    key = jax.random.PRNGKey(0)
    num_features, d1, d2 = 1, 16, 16

    k_x, k_e, k_w1, k_wf1, k_wf2, k_x2, k_e2 = jax.random.split(key, 7)
    params = {
        "w_conv": _glorot(k_w1, (num_features, d1)),   # glorot(self.weight)
        "b_conv": jnp.zeros((d1,), jnp.float32),       # zeros(self.bias)
        "w_fc1":  _glorot(k_wf1, (d1, d2)),
        "b_fc1":  jnp.zeros((d2,), jnp.float32),
        "w_fc2":  _glorot(k_wf2, (d2, num_features)),
        "b_fc2":  jnp.zeros((num_features,), jnp.float32),
    }

    # Small case (single grid step).
    N, E = 128, 256
    x = jax.random.normal(k_x, (N, num_features), jnp.float32)
    edge_neighbors = jax.random.randint(k_e, (2, E), 0, N, jnp.int32)
    out = netlgcn2_forward(x, edge_neighbors, params)
    jax.block_until_ready(out)
    assert out.shape == (N, num_features)
    ref = _reference(x, edge_neighbors, params)
    assert jnp.allclose(out, ref, rtol=1e-4, atol=1e-5), "mismatch vs reference (N=128)"

    # Non-multiple-of-128 case: exercises lane padding and the >=2-step grid.
    N2, E2 = 300, 700
    x2 = jax.random.normal(k_x2, (N2, num_features), jnp.float32)
    edge_neighbors2 = jax.random.randint(k_e2, (2, E2), 0, N2, jnp.int32)
    out2 = netlgcn2_forward(x2, edge_neighbors2, params)
    jax.block_until_ready(out2)
    assert out2.shape == (N2, num_features)
    ref2 = _reference(x2, edge_neighbors2, params)
    assert jnp.allclose(out2, ref2, rtol=1e-4, atol=1e-5), "mismatch vs reference (N=300)"

    print("KERNEL_OK")
</pallas_src>

<mosaic_0001>
module attributes {stable_mosaic.version = 11 : i64} {
  func.func @netlgcn2_kernel(%arg0: i32, %arg1: memref<2x128xf32, #tpu.memory_space<vmem>>, %arg2: memref<16x1xf32, #tpu.memory_space<vmem>>, %arg3: memref<16x1xf32, #tpu.memory_space<vmem>>, %arg4: memref<16x16xf32, #tpu.memory_space<vmem>>, %arg5: memref<16x1xf32, #tpu.memory_space<vmem>>, %arg6: memref<1x16xf32, #tpu.memory_space<vmem>>, %arg7: memref<1x1xf32, #tpu.memory_space<vmem>>, %arg8: memref<1x128xf32, #tpu.memory_space<vmem>>) attributes {dimension_semantics = [#tpu.dimension_semantics<parallel>], iteration_bounds = array<i64: 1>, scalar_prefetch = 0 : i64, scratch_operands = 0 : i64, tpu.core_type = #tpu.core_type<tc>, window_params = [{transform_indices = @transform_0, window_bounds = array<i64: 2, 128>}, {pipeline_mode = #tpu.pipeline_mode<synchronous>, transform_indices = @transform_1, window_bounds = array<i64: 16, 1>}, {pipeline_mode = #tpu.pipeline_mode<synchronous>, transform_indices = @transform_2, window_bounds = array<i64: 16, 1>}, {pipeline_mode = #tpu.pipeline_mode<synchronous>, transform_indices = @transform_3, window_bounds = array<i64: 16, 16>}, {pipeline_mode = #tpu.pipeline_mode<synchronous>, transform_indices = @transform_4, window_bounds = array<i64: 16, 1>}, {pipeline_mode = #tpu.pipeline_mode<synchronous>, transform_indices = @transform_5, window_bounds = array<i64: 1, 16>}, {pipeline_mode = #tpu.pipeline_mode<synchronous>, transform_indices = @transform_6, window_bounds = array<i64: 1, 1>}, {transform_indices = @transform_7, window_bounds = array<i64: 1, 128>}]} {
    %c0 = arith.constant 0 : index
    %c0_0 = arith.constant 0 : index
    %0 = vector.load %arg1[%c0, %c0_0] : memref<2x128xf32, #tpu.memory_space<vmem>>, vector<1x128xf32>
    %c1 = arith.constant 1 : index
    %c0_1 = arith.constant 0 : index
    %1 = vector.load %arg1[%c1, %c0_1] : memref<2x128xf32, #tpu.memory_space<vmem>>, vector<1x128xf32>
    %c0_2 = arith.constant 0 : index
    %c0_3 = arith.constant 0 : index
    %2 = vector.load %arg2[%c0_2, %c0_3] : memref<16x1xf32, #tpu.memory_space<vmem>>, vector<16x1xf32>
    %3 = vector.broadcast %2 : vector<16x1xf32> to vector<16x128xf32>
    %4 = vector.broadcast %1 : vector<1x128xf32> to vector<16x128xf32>
    %5 = arith.mulf %3, %4 : vector<16x128xf32>
    %6 = vector.broadcast %0 : vector<1x128xf32> to vector<16x128xf32>
    %7 = arith.mulf %6, %5 : vector<16x128xf32>
    %c0_4 = arith.constant 0 : index
    %c0_5 = arith.constant 0 : index
    %8 = vector.load %arg3[%c0_4, %c0_5] : memref<16x1xf32, #tpu.memory_space<vmem>>, vector<16x1xf32>
    %9 = vector.broadcast %8 : vector<16x1xf32> to vector<16x128xf32>
    %10 = arith.addf %7, %9 : vector<16x128xf32>
    %cst = arith.constant 0.000000e+00 : f32
    %11 = vector.broadcast %cst : f32 to vector<16x128xf32>
    %12 = arith.maximumf %10, %11 : vector<16x128xf32>
    %c0_6 = arith.constant 0 : index
    %c0_7 = arith.constant 0 : index
    %13 = vector.load %arg4[%c0_6, %c0_7] : memref<16x16xf32, #tpu.memory_space<vmem>>, vector<16x16xf32>
    %cst_8 = arith.constant dense<0.000000e+00> : vector<16x128xf32>
    %14 = tpu.matmul %13, %12, %cst_8 {dimension_numbers = #tpu.dot_dimension_numbers<[1], [0], [0], [1], [0, 0, 1, 1], [], []>} : vector<16x16xf32>, vector<16x128xf32>, vector<16x128xf32> -> vector<16x128xf32>
    %c0_9 = arith.constant 0 : index
    %c0_10 = arith.constant 0 : index
    %15 = vector.load %arg5[%c0_9, %c0_10] : memref<16x1xf32, #tpu.memory_space<vmem>>, vector<16x1xf32>
    %16 = vector.broadcast %15 : vector<16x1xf32> to vector<16x128xf32>
    %17 = arith.addf %14, %16 : vector<16x128xf32>
    %cst_11 = arith.constant 0.000000e+00 : f32
    %18 = vector.broadcast %cst_11 : f32 to vector<16x128xf32>
    %19 = arith.maximumf %17, %18 : vector<16x128xf32>
    %c0_12 = arith.constant 0 : index
    %c0_13 = arith.constant 0 : index
    %20 = vector.load %arg6[%c0_12, %c0_13] : memref<1x16xf32, #tpu.memory_space<vmem>>, vector<1x16xf32>
    %cst_14 = arith.constant dense<0.000000e+00> : vector<1x128xf32>
    %21 = tpu.matmul %20, %19, %cst_14 {dimension_numbers = #tpu.dot_dimension_numbers<[1], [0], [0], [1], [0, 0, 1, 1], [], []>} : vector<1x16xf32>, vector<16x128xf32>, vector<1x128xf32> -> vector<1x128xf32>
    %c0_15 = arith.constant 0 : index
    %c0_16 = arith.constant 0 : index
    %22 = vector.load %arg7[%c0_15, %c0_16] : memref<1x1xf32, #tpu.memory_space<vmem>>, vector<1x1xf32>
    %23 = vector.broadcast %22 : vector<1x1xf32> to vector<1x128xf32>
    %24 = arith.addf %21, %23 : vector<1x128xf32>
    %c0_17 = arith.constant 0 : index
    %c0_18 = arith.constant 0 : index
    %25 = vector.load %arg8[%c0_17, %c0_18] : memref<1x128xf32, #tpu.memory_space<vmem>>, vector<1x128xf32>
    tpu.vector_store %arg8[%c0_17, %c0_18], %24 {strides = array<i32>} : memref<1x128xf32, #tpu.memory_space<vmem>>, vector<1x128xf32>,
    return
  }
  func.func @transform_0(%arg0: i32) -> (i32, i32) {
    %c0_i32 = arith.constant 0 : i32
    %c0_i32_0 = arith.constant 0 : i32
    return %c0_i32, %arg0 : i32, i32
  }
  func.func @transform_1(%arg0: i32) -> (i32, i32) {
    %c0_i32 = arith.constant 0 : i32
    %c0_i32_0 = arith.constant 0 : i32
    %c0_i32_1 = arith.constant 0 : i32
    return %c0_i32, %c0_i32_0 : i32, i32
  }
  func.func @transform_2(%arg0: i32) -> (i32, i32) {
    %c0_i32 = arith.constant 0 : i32
    %c0_i32_0 = arith.constant 0 : i32
    %c0_i32_1 = arith.constant 0 : i32
    return %c0_i32, %c0_i32_0 : i32, i32
  }
  func.func @transform_3(%arg0: i32) -> (i32, i32) {
    %c0_i32 = arith.constant 0 : i32
    %c0_i32_0 = arith.constant 0 : i32
    %c0_i32_1 = arith.constant 0 : i32
    return %c0_i32, %c0_i32_0 : i32, i32
  }
  func.func @transform_4(%arg0: i32) -> (i32, i32) {
    %c0_i32 = arith.constant 0 : i32
    %c0_i32_0 = arith.constant 0 : i32
    %c0_i32_1 = arith.constant 0 : i32
    return %c0_i32, %c0_i32_0 : i32, i32
  }
  func.func @transform_5(%arg0: i32) -> (i32, i32) {
    %c0_i32 = arith.constant 0 : i32
    %c0_i32_0 = arith.constant 0 : i32
    %c0_i32_1 = arith.constant 0 : i32
    return %c0_i32, %c0_i32_0 : i32, i32
  }
  func.func @transform_6(%arg0: i32) -> (i32, i32) {
    %c0_i32 = arith.constant 0 : i32
    %c0_i32_0 = arith.constant 0 : i32
    %c0_i32_1 = arith.constant 0 : i32
    return %c0_i32, %c0_i32_0 : i32, i32
  }
  func.func @transform_7(%arg0: i32) -> (i32, i32) {
    %c0_i32 = arith.constant 0 : i32
    %c0_i32_0 = arith.constant 0 : i32
    return %c0_i32, %arg0 : i32, i32
  }
}

</mosaic_0001>

<llo_original>
// kernel: tpu_custom_call.1
$region0: #{tpu_custom_call.1}
  #allocation0 [shape = 'u32[]', space=smem, size = 0x4, offset = 0x4, fixed_abs, tag = 'smem constant byte address 0x4 - core index']
  #allocation1 [shape = 'u32[144,128]{1,0:T(1,128)}', space=vmem, size = 0x12000, scoped, tag = 'internal scratch']
  #allocation2 [shape = 'f32[1,1]{1,0:T(1,128)S(1)}', space=vmem, size = 0x200, scoped, tag = 'scoped memory for tpu_custom_call.1']
  %s0 = inlined_call_operand.vmem [shape: f32[2,128], index: 0, kind: input, shape index: {}]
  %s1 = inlined_call_operand.vmem [shape: f32[16,1], index: 1, kind: input, shape index: {}]
  %s2 = inlined_call_operand.vmem [shape: f32[16,1], index: 2, kind: input, shape index: {}]
  %s3 = inlined_call_operand.vmem [shape: f32[16,16], index: 3, kind: input, shape index: {}]
  %s4 = inlined_call_operand.vmem [shape: f32[16,1], index: 4, kind: input, shape index: {}]
  %s5 = inlined_call_operand.vmem [shape: f32[1,16], index: 5, kind: input, shape index: {}]
  %s6 = inlined_call_operand.<no memory space> [shape: f32[1,1], index: 6, kind: input, shape index: {}]
  %s7 = inlined_call_operand.hbm [shape: f32[1,128], index: 7, kind: output, shape index: {}]
  %s8 = sld [smem:[#allocation0]]
  $region38: #{tpu_custom_call.1} parent=0
    _
  %s10 = ssub.s32 1, %s8
  %s11 = scalar_select 0, %s10, %s8
  %v12 = vstv %s6
  %13 = vst [vmem:[#allocation2] sm:$0x1] %v12
  $region1: #{tpu_custom_call.1} parent=0
    #allocation3 [shape = 'u8[512]{0}', space=vmem, size = 0x400, scoped, tag = 'output window, operand 0, single buffered']
    #allocation4 [shape = 's32[1]{0}', space=sflag, size = 0x4, scoped, tag = 'scoped memory for tpu_custom_call.1']
    %14 = vsyncpa [#allocation4], 0
    // Predicated region
    $region2: #{tpu_custom_call.1} parent=1 // pred_check
      _
    $region3: #{tpu_custom_call.1} parent=1 // pred_check_branch
      %16 = sbr.rel (0) target = $region5
    $region4: #{tpu_custom_call.1} parent=1 // pred_region
      _
    $region5: #{tpu_custom_call.1} parent=1 // pred_fallthru
      _
    // Predicated region
    $region6: #{tpu_custom_call.1} parent=1 // pred_check
      _
    $region7: #{tpu_custom_call.1} parent=1 // pred_check_branch
      %18 = sbr.rel (0) target = $region9
    $region8: #{tpu_custom_call.1} parent=1 // pred_region
      _
    $region9: #{tpu_custom_call.1} parent=1 // pred_fallthru
      _
    // Predicated region
    $region10: #{tpu_custom_call.1} parent=1 // pred_check
      _
    $region11: #{tpu_custom_call.1} parent=1 // pred_check_branch
      %20 = sbr.rel (0) target = $region13
    $region12: #{tpu_custom_call.1} parent=1 // pred_region
      _
    $region13: #{tpu_custom_call.1} parent=1 // pred_fallthru
      _
    // Predicated region
    $region14: #{tpu_custom_call.1} parent=1 // pred_check
      _
    $region15: #{tpu_custom_call.1} parent=1 // pred_check_branch
      %22 = sbr.rel (0) target = $region17
    $region16: #{tpu_custom_call.1} parent=1 // pred_region
      _
    $region17: #{tpu_custom_call.1} parent=1 // pred_fallthru
      _
    // Predicated region
    $region18: #{tpu_custom_call.1} parent=1 // pred_check
      _
    $region19: #{tpu_custom_call.1} parent=1 // pred_check_branch
      %24 = sbr.rel (0) target = $region21
    $region20: #{tpu_custom_call.1} parent=1 // pred_region
      _
    $region21: #{tpu_custom_call.1} parent=1 // pred_fallthru
      _
    // Predicated region
    $region22: #{tpu_custom_call.1} parent=1 // pred_check
      _
    $region23: #{tpu_custom_call.1} parent=1 // pred_check_branch
      %26 = sbr.rel (0) target = $region25
    $region24: #{tpu_custom_call.1} parent=1 // pred_region
      _
    $region25: #{tpu_custom_call.1} parent=1 // pred_fallthru
      _
    // Predicated region
    $region26: #{tpu_custom_call.1} parent=1 // pred_check
      _
    $region27: #{tpu_custom_call.1} parent=1 // pred_check_branch
      %28 = sbr.rel (0) target = $region29
    $region28: #{tpu_custom_call.1} parent=1 // pred_region
      _
    $region29: #{tpu_custom_call.1} parent=1 // pred_fallthru
      _
    %v29 = vld [vmem:[%s0] sm:$0x1]
    %v30 = vld [vmem:[%s0 + $0x1] sm:$0x1]
    %v31 = vld [vmem:[%s1] sm:$0xff]
    %v32 = vld [vmem:[%s1 + $0x8] sm:$0xff]
    %34 = vset.pattern.permute.xlu0 0
    %35 = vperm.xlu0 %34, %v31
    %v36 = vpop.permute.xlu0 %35
    %39 = vset.pattern.permute.xlu0 0
    %40 = vperm.xlu0 %39, %v32
    %v41 = vpop.permute.xlu0 %40
    %v43 = vlaneseq
    %v44 = vshrl.u32 %v43, 7
    %v45 = vsub.s32 0, %v44
    %v46 = vrot.slane %v30, %v45
    %v47 = vmul.f32 %v36, %v46
    %v48 = vmul.f32 %v41, %v46
    %v49 = vlaneseq
    %v50 = vshrl.u32 %v49, 7
    %v51 = vsub.s32 0, %v50
    %v52 = vrot.slane %v29, %v51
    %v53 = vmul.f32 %v52, %v47
    %v54 = vmul.f32 %v52, %v48
    %v55 = vld [vmem:[%s2] sm:$0xff]
    %v56 = vld [vmem:[%s2 + $0x8] sm:$0xff]
    %58 = vset.pattern.permute.xlu0 0
    %59 = vperm.xlu0 %58, %v55
    %v60 = vpop.permute.xlu0 %59
    %63 = vset.pattern.permute.xlu0 0
    %64 = vperm.xlu0 %63, %v56
    %v65 = vpop.permute.xlu0 %64
    %v67 = vadd.f32 %v53, %v60
    %v68 = vadd.f32 %v54, %v65
    %v69 = vmax.f32 %v67, 0.0
    %v70 = vmax.f32 %v68, 0.0
    %v71 = vld [vmem:[%s3] sm:$0xff]
    %v72 = vld [vmem:[%s3 + $0x8] sm:$0xff]
    %v73 = vld [vmem:[%s4] sm:$0xff]
    %v74 = vld [vmem:[%s4 + $0x8] sm:$0xff]
    %76 = vset.pattern.permute.xlu0 0
    %77 = vperm.xlu0 %76, %v73
    %v78 = vpop.permute.xlu0 %77
    %81 = vset.pattern.permute.xlu0 0
    %82 = vperm.xlu0 %81, %v74
    %v83 = vpop.permute.xlu0 %82
    %vm85 = vcmask 130048
    %v87 = vsel %vm85, %v71, 0
    %v90 = vsel %vm85, %v72, 0
    %92 = vmatprep.subr.mxu0 0.0
    %93 = vmatpush1.msra.mxu0 %v69
    %94 = vmatprep.subr.mxu0 0.0
    %95 = vmatpush1.msra.mxu0 %v70
    %96 = vmatprep.subr.mxu0 0.0
    %97 = vmatpush1.msra.mxu0 0.0
    %98 = vmatprep.subr.mxu0 0.0
    %99 = vmatpush1.msra.mxu0 0.0
    %100 = vmatprep.subr.mxu0 0.0
    %101 = vmatpush1.msra.mxu0 0.0
    %102 = vmatprep.subr.mxu0 0.0
    %103 = vmatpush1.msra.mxu0 0.0
    %104 = vmatprep.subr.mxu0 0.0
    %105 = vmatpush1.msra.mxu0 0.0
    %106 = vmatprep.subr.mxu0 0.0
    %107 = vmatpush1.msra.mxu0 0.0
    %108 = vmatprep.subr.mxu0 0.0
    %109 = vmatpush1.msra.mxu0 0.0
    %110 = vmatprep.subr.mxu0 0.0
    %111 = vmatpush1.msra.mxu0 0.0
    %112 = vmatprep.subr.mxu0 0.0
    %113 = vmatpush1.msra.mxu0 0.0
    %114 = vmatprep.subr.mxu0 0.0
    %115 = vmatpush1.msra.mxu0 0.0
    %116 = vmatprep.subr.mxu0 0.0
    %117 = vmatpush1.msra.mxu0 0.0
    %118 = vmatprep.subr.mxu0 0.0
    %119 = vmatpush1.msra.mxu0 0.0
    %120 = vmatprep.subr.mxu0 0.0
    %121 = vmatpush1.msra.mxu0 0.0
    %122 = vmatprep.subr.mxu0 0.0
    %123 = vmatpush1.msra.mxu0 0.0
    %124 = vmatprep.subr.mxu0 0.0
    %125 = vmatpush1.msra.mxu0 0.0
    %126 = vmatprep.subr.mxu0 0.0
    %127 = vmatpush1.msra.mxu0 0.0
    %128 = vmatprep.subr.mxu0 0.0
    %129 = vmatpush1.msra.mxu0 0.0
    %130 = vmatprep.subr.mxu0 0.0
    %131 = vmatpush1.msra.mxu0 0.0
    %132 = vmatprep.subr.mxu0 0.0
    %133 = vmatpush1.msra.mxu0 0.0
    %134 = vmatprep.subr.mxu0 0.0
    %135 = vmatpush1.msra.mxu0 0.0
    %136 = vmatprep.subr.mxu0 0.0
    %137 = vmatpush1.msra.mxu0 0.0
    %138 = vmatprep.subr.mxu0 0.0
    %139 = vmatpush1.msra.mxu0 0.0
    %140 = vmatprep.subr.mxu0 0.0
    %141 = vmatpush1.msra.mxu0 0.0
    %142 = vmatprep.subr.mxu0 0.0
    %143 = vmatpush1.msra.mxu0 0.0
    %144 = vmatprep.subr.mxu0 0.0
    %145 = vmatpush1.msra.mxu0 0.0
    %146 = vmatprep.subr.mxu0 0.0
    %147 = vmatpush1.msra.mxu0 0.0
    %148 = vmatprep.subr.mxu0 0.0
    %149 = vmatpush1.msra.mxu0 0.0
    %150 = vmatprep.subr.mxu0 0.0
    %151 = vmatpush1.msra.mxu0 0.0
    %152 = vmatprep.subr.mxu0 0.0
    %153 = vmatpush1.msra.mxu0 0.0
    %154 = vmatprep.subr.mxu0 0.0
    %155 = vmatpush1.msra.mxu0 0.0
    %156 = vmatprep.mubr.f32.mxu0 0.0
    %157 = vmatmul.mubr.f32.gmra.mrb[0].mxu0 %v87
    %v158 = vpop.f32.mrb[0].mxu0
    %v159 = vadd.f32 %v78, %v158
    %v160 = vpop.f32.mrb[0].mxu0
    %161 = vmatprep.mubr.f32.mxu0 0.0
    %162 = vmatmul.mubr.f32.gmra.mrb[0].mxu0 %v90
    %v163 = vpop.f32.mrb[0].mxu0
    %v164 = vadd.f32 %v83, %v163
    %v165 = vpop.f32.mrb[0].mxu0
    %166 = vdwg.mxu0
    %v167 = vmax.f32 %v159, 0.0
    %v168 = vmax.f32 %v164, 0.0
    %v169 = vld [vmem:[%s5] sm:$0x1]
    %v170 = vld [vmem:[#allocation2] sm:$0x1]
    %172 = vset.pattern.permute.xlu0 0
    %173 = vperm.xlu0 %172, %v170
    %v174 = vpop.permute.xlu0 %173
    %v176 = vlaneseq
    %v177 = vshrl.u32 %v176, 7
    %v178 = vsub.s32 0, %v177
    %v179 = vrot.slane %v174, %v178
    %v181 = vsel %vm85, %v169, 0
    %183 = vmatprep.subr.mxu0 0.0
    %184 = vmatpush1.msra.mxu0 %v167
    %185 = vmatprep.subr.mxu0 0.0
    %186 = vmatpush1.msra.mxu0 %v168
    %187 = vmatprep.subr.mxu0 0.0
    %188 = vmatpush1.msra.mxu0 0.0
    %189 = vmatprep.subr.mxu0 0.0
    %190 = vmatpush1.msra.mxu0 0.0
    %191 = vmatprep.subr.mxu0 0.0
    %192 = vmatpush1.msra.mxu0 0.0
    %193 = vmatprep.subr.mxu0 0.0
    %194 = vmatpush1.msra.mxu0 0.0
    %195 = vmatprep.subr.mxu0 0.0
    %196 = vmatpush1.msra.mxu0 0.0
    %197 = vmatprep.subr.mxu0 0.0
    %198 = vmatpush1.msra.mxu0 0.0
    %199 = vmatprep.subr.mxu0 0.0
    %200 = vmatpush1.msra.mxu0 0.0
    %201 = vmatprep.subr.mxu0 0.0
    %202 = vmatpush1.msra.mxu0 0.0
    %203 = vmatprep.subr.mxu0 0.0
    %204 = vmatpush1.msra.mxu0 0.0
    %205 = vmatprep.subr.mxu0 0.0
    %206 = vmatpush1.msra.mxu0 0.0
    %207 = vmatprep.subr.mxu0 0.0
    %208 = vmatpush1.msra.mxu0 0.0
    %209 = vmatprep.subr.mxu0 0.0
    %210 = vmatpush1.msra.mxu0 0.0
    %211 = vmatprep.subr.mxu0 0.0
    %212 = vmatpush1.msra.mxu0 0.0
    %213 = vmatprep.subr.mxu0 0.0
    %214 = vmatpush1.msra.mxu0 0.0
    %215 = vmatprep.subr.mxu0 0.0
    %216 = vmatpush1.msra.mxu0 0.0
    %217 = vmatprep.subr.mxu0 0.0
    %218 = vmatpush1.msra.mxu0 0.0
    %219 = vmatprep.subr.mxu0 0.0
    %220 = vmatpush1.msra.mxu0 0.0
    %221 = vmatprep.subr.mxu0 0.0
    %222 = vmatpush1.msra.mxu0 0.0
    %223 = vmatprep.subr.mxu0 0.0
    %224 = vmatpush1.msra.mxu0 0.0
    %225 = vmatprep.subr.mxu0 0.0
    %226 = vmatpush1.msra.mxu0 0.0
    %227 = vmatprep.subr.mxu0 0.0
    %228 = vmatpush1.msra.mxu0 0.0
    %229 = vmatprep.subr.mxu0 0.0
    %230 = vmatpush1.msra.mxu0 0.0
    %231 = vmatprep.subr.mxu0 0.0
    %232 = vmatpush1.msra.mxu0 0.0
    %233 = vmatprep.subr.mxu0 0.0
    %234 = vmatpush1.msra.mxu0 0.0
    %235 = vmatprep.subr.mxu0 0.0
    %236 = vmatpush1.msra.mxu0 0.0
    %237 = vmatprep.subr.mxu0 0.0
    %238 = vmatpush1.msra.mxu0 0.0
    %239 = vmatprep.subr.mxu0 0.0
    %240 = vmatpush1.msra.mxu0 0.0
    %241 = vmatprep.subr.mxu0 0.0
    %242 = vmatpush1.msra.mxu0 0.0
    %243 = vmatprep.subr.mxu0 0.0
    %244 = vmatpush1.msra.mxu0 0.0
    %245 = vmatprep.subr.mxu0 0.0
    %246 = vmatpush1.msra.mxu0 0.0
    %247 = vmatprep.mubr.f32.mxu0 0.0
    %248 = vmatmul.mubr.f32.gmra.mrb[0].mxu0 %v181
    %v249 = vpop.f32.mrb[0].mxu0
    %v250 = vadd.f32 %v179, %v249
    %v251 = vpop.f32.mrb[0].mxu0
    %252 = vdwg.mxu0
    %253 = vst [vmem:[#allocation3] sm:$0x1] %v250
    // Predicated region
    $region30: #{tpu_custom_call.1} parent=1 // pred_check
      _
    $region31: #{tpu_custom_call.1} parent=1 // pred_check_branch
      %255 = sbr.rel (0) target = $region33
    $region32: #{tpu_custom_call.1} parent=1 // pred_region
      %s257 = ssub.s32 16, 16
      %258 = vsyncadd [#allocation4], %s257
      %s260 = sshll.u32 [#allocation3], 4
      %s261 = int_to_ptr.vmem [resolvable:$true] %s260
      %263 = dma.vmem_to_hbm [thread:$0]  %s261, 16, %s7, [#allocation4]
    $region33: #{tpu_custom_call.1} parent=1 // pred_fallthru
      _
    // Predicated region
    $region34: #{tpu_custom_call.1} parent=1 // pred_check
      _
    $region35: #{tpu_custom_call.1} parent=1 // pred_check_branch
      %265 = sbr.rel (0) target = $region37
    $region36: #{tpu_custom_call.1} parent=1 // pred_region
      %266 = dma.done [#allocation4], 16
    $region37: #{tpu_custom_call.1} parent=1 // pred_fallthru
      _
    %267 = vsyncpa [#allocation4], 1

</llo_original>
